<compile_context>
chip_gen: v5e
topology: v5e:2x2
jax: 0.10.0
libtpu: 0.0.40
codegen_flags: <defaults>
</compile_context>

<pallas_src>
import functools

import jax
import jax.numpy as jnp
import numpy as np
from jax.experimental import pallas as pl
from jax.experimental.pallas import tpu as pltpu


# ------------------------------ helpers -------------------------------------

def _round_up(x, m):
    return ((x + m - 1) // m) * m


def _sublane(itemsize):
    # f32 -> 8, bf16 -> 16, int8/fp8 -> 32
    return max(8, 32 // max(itemsize, 1))


def _vmem_limit_bytes():
    """Generation-aware VMEM budget (v7x: 64 MiB physical, v5e/v6e: 128 MiB)."""
    cap = None
    try:
        info = pltpu.get_tpu_info()
        cap = getattr(info, "vmem_capacity_bytes", None)
    except Exception:
        cap = None
    if not cap or cap <= 0:
        cap = 64 * 1024 * 1024          # safe on every generation
    return int(min(cap * 3 // 4, 96 * 1024 * 1024))


# ------------------------------ kernels -------------------------------------

def _se_fused_kernel(x_ref, w1_ref, b1_ref, w2_ref, b2_ref, o_ref, *, inv_hw):
    """Single pass over x: pool -> tiny per-sample MLP -> scale.  Block holds
    nb whole samples: x_ref is (nb, C, HW)."""
    x = x_ref[...]                                                    # (nb, C, HW)
    pooled = jnp.sum(x.astype(jnp.float32), axis=-1,
                     keepdims=True) * inv_hw                          # (nb, C, 1)
    # Per-sample excitation as batched matvecs (batch = samples in block).
    z1 = jnp.einsum("nsc,ncx->nsx", w1_ref[...], pooled,
                    preferred_element_type=jnp.float32) + b1_ref[...]  # (nb, se, 1)
    s1 = z1 * jax.nn.sigmoid(z1)                                       # swish
    z2 = jnp.einsum("ncs,nsx->ncx", w2_ref[...], s1,
                    preferred_element_type=jnp.float32) + b2_ref[...]  # (nb, C, 1)
    gate = jax.nn.sigmoid(z2).astype(x.dtype)                          # (nb, C, 1)
    o_ref[...] = x * gate


def _se_pool_kernel(x_ref, psum_ref, *, hw, lane_tile, t_steps, need_mask):
    """Pass 1: accumulate per-row sums (f32) over lane tiles (masked if ragged)."""
    p = pl.program_id(1)
    t = pl.program_id(2)
    x = x_ref[...].astype(jnp.float32)                                 # (rb, lane_tile)
    if need_mask:
        start = (p * t_steps + t) * lane_tile
        col = jax.lax.broadcasted_iota(jnp.int32, x.shape, 1) + start
        x = jnp.where(col < hw, x, 0.0)
    part = jnp.sum(x, axis=-1, keepdims=True)                          # (rb, 1)

    @pl.when(t == 0)
    def _():
        psum_ref[...] = part

    @pl.when(t > 0)
    def _():
        psum_ref[...] = psum_ref[...] + part


def _se_scale_kernel(g_ref, x_ref, o_ref):
    """Pass 2: pure stream, out = gate * x (gate precomputed, no weights here)."""
    o_ref[...] = x_ref[...] * g_ref[...]


# --------------------------- planning heuristics -----------------------------

_NB_MAX = 16                       # samples per fused block (keeps gate math cheap)
_TINY_BYTES = 2 * 1024 * 1024      # whole tensors below this always fuse
_MIN_FUSED_SAMPLE_BYTES = 128 * 1024


def _fused_plan(n, c, hw, itemsize, vmem_limit):
    """Return nb (samples per fused block), or None to use the tiled path."""
    pad_c = _round_up(c, _sublane(itemsize))
    pad_hw = _round_up(hw, 128)
    per_sample_vmem = pad_c * pad_hw * itemsize
    per_sample_hbm = c * hw * itemsize
    total_hbm = n * per_sample_hbm

    tiny = (total_hbm <= _TINY_BYTES) and (n <= _NB_MAX)
    big_sample = per_sample_hbm >= _MIN_FUSED_SAMPLE_BYTES
    if not (tiny or (big_sample and n >= 2)):
        return None

    target = max(1 << 20, min(8 << 20, vmem_limit // 10))
    if tiny:
        nb = n
    else:
        # keep >= 2 grid steps so megacore / pipelining stay useful
        nb = max(1, min(n, _NB_MAX, target // max(per_sample_vmem, 1),
                        pl.cdiv(n, 2)))
    # in + out blocks are each double-buffered; leave slack for weights & misc.
    while nb > 1 and 4 * nb * per_sample_vmem + (2 << 20) > vmem_limit:
        nb -= 1
    if 4 * nb * per_sample_vmem + (2 << 20) > vmem_limit:
        return None
    return nb


def _tiled_plan(n_rows, hw, itemsize, vmem_limit):
    """Pick (row_tile, lane_tile) for the streaming passes."""
    target = max(512 * 1024, min(8 << 20, vmem_limit // 10))
    sub = _sublane(itemsize)
    lt = _round_up(hw, 128)
    max_lt = max(128, (target // (sub * itemsize)) // 128 * 128)
    lt = min(lt, max_lt)
    if lt >= hw:
        lt = hw                       # full lane extent: always legal
    rb = (target // (lt * itemsize)) // sub * sub
    rb = max(sub, rb)
    if rb >= n_rows:
        rb = n_rows                   # full row extent: always legal
    return rb, lt


# ------------------------------ wrapper --------------------------------------

def se_forward(x_nchw, w1, b1, w2, b2, *, force_tiled=False, tile_override=None):
    """SE block forward on native NCHW layout.

    x_nchw: (N, C, H, W)
    w1: (se, C)  == se1.weight[:, :, 0, 0];   b1: (se,) == se1.bias
    w2: (C, se)  == se2.weight[:, :, 0, 0];   b2: (C,)  == se2.bias
    """
    N, C, H, W = x_nchw.shape
    se = w1.shape[0]
    HW = H * W
    dtype = x_nchw.dtype
    itemsize = jnp.dtype(dtype).itemsize
    inv_hw = 1.0 / HW
    vmem_limit = _vmem_limit_bytes()

    w1f = w1.astype(jnp.float32)
    w2f = w2.astype(jnp.float32)
    b1f = b1.astype(jnp.float32)
    b2f = b2.astype(jnp.float32)

    nb = None if force_tiled else _fused_plan(N, C, HW, itemsize, vmem_limit)

    # ----------------------- fused single-pass path -------------------------
    if nb is not None:
        x3 = x_nchw.reshape(N, C, HW)
        w1b = jnp.broadcast_to(w1f[None], (nb, se, C))
        w2b = jnp.broadcast_to(w2f[None], (nb, C, se))
        b1b = jnp.broadcast_to(b1f.reshape(1, se, 1), (nb, se, 1))
        b2b = jnp.broadcast_to(b2f.reshape(1, C, 1), (nb, C, 1))
        kernel = functools.partial(_se_fused_kernel, inv_hw=inv_hw)
        out = pl.pallas_call(
            kernel,
            out_shape=jax.ShapeDtypeStruct((N, C, HW), dtype),
            grid=(pl.cdiv(N, nb),),
            in_specs=[
                pl.BlockSpec((nb, C, HW), lambda i: (i, 0, 0)),
                pl.BlockSpec((nb, se, C), lambda i: (0, 0, 0)),
                pl.BlockSpec((nb, se, 1), lambda i: (0, 0, 0)),
                pl.BlockSpec((nb, C, se), lambda i: (0, 0, 0)),
                pl.BlockSpec((nb, C, 1), lambda i: (0, 0, 0)),
            ],
            out_specs=pl.BlockSpec((nb, C, HW), lambda i: (i, 0, 0)),
            compiler_params=pltpu.CompilerParams(
                dimension_semantics=("parallel",),
                vmem_limit_bytes=vmem_limit),
            cost_estimate=pl.CostEstimate(
                flops=int(2 * N * C * HW + 4 * N * C * se),
                transcendentals=int(N * (2 * se + 2 * C)),
                bytes_accessed=int(2 * N * C * HW * itemsize)),
        )(x3, w1b, b1b, w2b, b2b)
        return out.reshape(N, C, H, W)

    # ------------------- tiled path: pool -> gate -> scale -------------------
    n_rows = N * C
    x_rows = x_nchw.reshape(n_rows, HW)            # free view, (8,128)-dense rows

    if tile_override is not None:
        rb, lt = tile_override
        sub = _sublane(itemsize)
        assert rb % sub == 0 or rb == n_rows, "row tile must be sublane-aligned"
        assert lt % 128 == 0 or lt == HW, "lane tile must be a multiple of 128"
    else:
        rb, lt = _tiled_plan(n_rows, HW, itemsize, vmem_limit)

    t_total = pl.cdiv(HW, lt)
    p_split = 2 if (t_total >= 2 and t_total % 2 == 0) else 1   # v7x: 2 TCs
    t_steps = t_total // p_split
    need_mask = (HW % lt) != 0
    r_blocks = pl.cdiv(n_rows, rb)

    # Pass 1: per-row sums (f32), accumulated over lane tiles; the HW axis is
    # split into p_split independent "parallel" chunks.
    pool_kernel = functools.partial(
        _se_pool_kernel, hw=HW, lane_tile=lt, t_steps=t_steps,
        need_mask=need_mask)
    psum = pl.pallas_call(
        pool_kernel,
        out_shape=jax.ShapeDtypeStruct((p_split, n_rows, 1), jnp.float32),
        grid=(r_blocks, p_split, t_steps),
        in_specs=[pl.BlockSpec((rb, lt),
                               lambda r, p, t: (r, p * t_steps + t))],
        out_specs=pl.BlockSpec((pl.Squeezed(), rb, 1),
                               lambda r, p, t: (p, r, 0)),
        compiler_params=pltpu.CompilerParams(
            dimension_semantics=("parallel", "parallel", "arbitrary"),
            vmem_limit_bytes=vmem_limit),
        cost_estimate=pl.CostEstimate(
            flops=int(n_rows * HW),
            transcendentals=0,
            bytes_accessed=int(n_rows * HW * itemsize)),
    )(x_rows)

    # Tiny excitation MLP, hoisted out of the streaming pass (plain JAX).
    pooled = psum.sum(axis=0).reshape(N, C) * inv_hw          # (N, C) f32
    z1 = pooled @ w1f.T + b1f
    s1 = z1 * jax.nn.sigmoid(z1)
    z2 = s1 @ w2f.T + b2f
    gate = jax.nn.sigmoid(z2).astype(dtype).reshape(n_rows, 1)

    # Pass 2: pure stream out = gate * x; lane-dense tiles, no weights in VMEM.
    out = pl.pallas_call(
        _se_scale_kernel,
        out_shape=jax.ShapeDtypeStruct((n_rows, HW), dtype),
        grid=(r_blocks, t_total),
        in_specs=[
            pl.BlockSpec((rb, 1), lambda r, l: (r, 0)),
            pl.BlockSpec((rb, lt), lambda r, l: (r, l)),
        ],
        out_specs=pl.BlockSpec((rb, lt), lambda r, l: (r, l)),
        compiler_params=pltpu.CompilerParams(
            dimension_semantics=("parallel", "parallel"),
            vmem_limit_bytes=vmem_limit),
        cost_estimate=pl.CostEstimate(
            flops=int(n_rows * HW),
            transcendentals=0,
            bytes_accessed=int(2 * n_rows * HW * itemsize)),
    )(gate, x_rows)
    return out.reshape(N, C, H, W)


# ------------------------------ reference ------------------------------------

def _se_reference(x_nchw, w1, b1, w2, b2):
    """Pure-JAX reference matching the PyTorch module (weights in torch layout)."""
    pooled = jnp.mean(x_nchw, axis=(2, 3))                 # (N, C)
    z1 = pooled @ w1.T + b1                                # (N, se)
    s1 = z1 * jax.nn.sigmoid(z1)
    z2 = s1 @ w2.T + b2                                    # (N, C)
    gate = jax.nn.sigmoid(z2)
    return x_nchw * gate[:, :, None, None]


if __name__ == "__main__":
    N, C, H, W = 2, 4, 16, 16
    SE_CH = 2

    key = jax.random.PRNGKey(0)
    kx, k1, k2, k3, k4 = jax.random.split(key, 5)

    x = jax.random.normal(kx, (N, C, H, W), dtype=jnp.float32)
    # PyTorch conv weight layouts, with the trailing 1x1 squeezed out:
    w1 = 0.5 * jax.random.normal(k1, (SE_CH, C), dtype=jnp.float32)   # se1.weight
    b1 = 0.1 * jax.random.normal(k2, (SE_CH,), dtype=jnp.float32)     # se1.bias
    w2 = 0.5 * jax.random.normal(k3, (C, SE_CH), dtype=jnp.float32)   # se2.weight
    b2 = 0.1 * jax.random.normal(k4, (C,), dtype=jnp.float32)         # se2.bias

    ref = _se_reference(x, w1, b1, w2, b2)

    # 1) fused single-pass path (used for small / typical per-sample blocks).
    out = jax.block_until_ready(se_forward(x, w1, b1, w2, b2))
    np.testing.assert_allclose(np.asarray(out), np.asarray(ref),
                               rtol=1e-5, atol=1e-5)

    # 2) tiled path (pool -> JAX gate -> scale) on the same input.
    out_t = jax.block_until_ready(
        se_forward(x, w1, b1, w2, b2, force_tiled=True))
    np.testing.assert_allclose(np.asarray(out_t), np.asarray(ref),
                               rtol=1e-5, atol=1e-5)

    # 3) tiled path with ragged lane tiles (HW = 289 is not a multiple of 128).
    x3 = jax.random.normal(kx, (N, C, 17, 17), dtype=jnp.float32)
    ref3 = _se_reference(x3, w1, b1, w2, b2)
    out3 = jax.block_until_ready(
        se_forward(x3, w1, b1, w2, b2, force_tiled=True, tile_override=(8, 128)))
    np.testing.assert_allclose(np.asarray(out3), np.asarray(ref3),
                               rtol=1e-5, atol=1e-5)

    # 4) tiled path with the HW reduction split into two parallel chunks.
    x4 = jax.random.normal(kx, (N, C, 16, 32), dtype=jnp.float32)
    ref4 = _se_reference(x4, w1, b1, w2, b2)
    out4 = jax.block_until_ready(
        se_forward(x4, w1, b1, w2, b2, force_tiled=True, tile_override=(8, 128)))
    np.testing.assert_allclose(np.asarray(out4), np.asarray(ref4),
                               rtol=1e-5, atol=1e-5)

    print("KERNEL_OK")
</pallas_src>

<mosaic_0001>
module attributes {stable_mosaic.version = 11 : i64} {
  func.func @_se_fused_kernel(%arg0: i32, %arg1: memref<2x4x256xf32, #tpu.memory_space<vmem>>, %arg2: memref<2x2x4xf32, #tpu.memory_space<vmem>>, %arg3: memref<2x2x1xf32, #tpu.memory_space<vmem>>, %arg4: memref<2x4x2xf32, #tpu.memory_space<vmem>>, %arg5: memref<2x4x1xf32, #tpu.memory_space<vmem>>, %arg6: memref<2x4x256xf32, #tpu.memory_space<vmem>>) attributes {dimension_semantics = [#tpu.dimension_semantics<parallel>], iteration_bounds = array<i64: 1>, scalar_prefetch = 0 : i64, scratch_operands = 0 : i64, tpu.core_type = #tpu.core_type<tc>, window_params = [{transform_indices = @transform_0, window_bounds = array<i64: 2, 4, 256>}, {pipeline_mode = #tpu.pipeline_mode<synchronous>, transform_indices = @transform_1, window_bounds = array<i64: 2, 2, 4>}, {pipeline_mode = #tpu.pipeline_mode<synchronous>, transform_indices = @transform_2, window_bounds = array<i64: 2, 2, 1>}, {pipeline_mode = #tpu.pipeline_mode<synchronous>, transform_indices = @transform_3, window_bounds = array<i64: 2, 4, 2>}, {pipeline_mode = #tpu.pipeline_mode<synchronous>, transform_indices = @transform_4, window_bounds = array<i64: 2, 4, 1>}, {transform_indices = @transform_5, window_bounds = array<i64: 2, 4, 256>}]} {
    %c0 = arith.constant 0 : index
    %c0_0 = arith.constant 0 : index
    %c0_1 = arith.constant 0 : index
    %0 = vector.load %arg1[%c0, %c0_0, %c0_1] : memref<2x4x256xf32, #tpu.memory_space<vmem>>, vector<2x4x256xf32>
    %cst = arith.constant dense<0.000000e+00> : vector<2x4xf32>
    %1 = vector.multi_reduction <add>, %0, %cst [2] : vector<2x4x256xf32> to vector<2x4xf32>
    %2 = vector.shape_cast %1 : vector<2x4xf32> to vector<2x4x1xf32>
    %cst_2 = arith.constant 3.906250e-03 : f32
    %3 = vector.broadcast %cst_2 : f32 to vector<2x4x1xf32>
    %4 = arith.mulf %2, %3 : vector<2x4x1xf32>
    %c0_3 = arith.constant 0 : index
    %c0_4 = arith.constant 0 : index
    %c0_5 = arith.constant 0 : index
    %5 = vector.load %arg2[%c0_3, %c0_4, %c0_5] : memref<2x2x4xf32, #tpu.memory_space<vmem>>, vector<2x2x4xf32>
    "tpu.trace_start"() <{level = 10 : i32, message = "nsc,ncx->nsx"}> : () -> ()
    %cst_6 = arith.constant dense<0.000000e+00> : vector<2x2x1xf32>
    %6 = tpu.matmul %5, %4, %cst_6 {dimension_numbers = #tpu.dot_dimension_numbers<[2], [1], [1], [2], [0, 0, 0, 1, 1, 2], [0], [0]>} : vector<2x2x4xf32>, vector<2x4x1xf32>, vector<2x2x1xf32> -> vector<2x2x1xf32>
    "tpu.trace_stop"() : () -> ()
    %c0_7 = arith.constant 0 : index
    %c0_8 = arith.constant 0 : index
    %c0_9 = arith.constant 0 : index
    %7 = vector.load %arg3[%c0_7, %c0_8, %c0_9] : memref<2x2x1xf32, #tpu.memory_space<vmem>>, vector<2x2x1xf32>
    %8 = arith.addf %6, %7 : vector<2x2x1xf32>
    %9 = arith.negf %8 : vector<2x2x1xf32>
    %10 = math.exp %9 : vector<2x2x1xf32>
    %cst_10 = arith.constant 1.000000e+00 : f32
    %11 = vector.broadcast %cst_10 : f32 to vector<2x2x1xf32>
    %12 = arith.addf %11, %10 : vector<2x2x1xf32>
    %13 = arith.divf %11, %12 : vector<2x2x1xf32>
    %14 = arith.mulf %8, %13 : vector<2x2x1xf32>
    %c0_11 = arith.constant 0 : index
    %c0_12 = arith.constant 0 : index
    %c0_13 = arith.constant 0 : index
    %15 = vector.load %arg4[%c0_11, %c0_12, %c0_13] : memref<2x4x2xf32, #tpu.memory_space<vmem>>, vector<2x4x2xf32>
    "tpu.trace_start"() <{level = 10 : i32, message = "ncs,nsx->ncx"}> : () -> ()
    %cst_14 = arith.constant dense<0.000000e+00> : vector<2x4x1xf32>
    %16 = tpu.matmul %15, %14, %cst_14 {dimension_numbers = #tpu.dot_dimension_numbers<[2], [1], [1], [2], [0, 0, 0, 1, 1, 2], [0], [0]>} : vector<2x4x2xf32>, vector<2x2x1xf32>, vector<2x4x1xf32> -> vector<2x4x1xf32>
    "tpu.trace_stop"() : () -> ()
    %c0_15 = arith.constant 0 : index
    %c0_16 = arith.constant 0 : index
    %c0_17 = arith.constant 0 : index
    %17 = vector.load %arg5[%c0_15, %c0_16, %c0_17] : memref<2x4x1xf32, #tpu.memory_space<vmem>>, vector<2x4x1xf32>
    %18 = arith.addf %16, %17 : vector<2x4x1xf32>
    %19 = arith.negf %18 : vector<2x4x1xf32>
    %20 = math.exp %19 : vector<2x4x1xf32>
    %cst_18 = arith.constant 1.000000e+00 : f32
    %21 = vector.broadcast %cst_18 : f32 to vector<2x4x1xf32>
    %22 = arith.addf %21, %20 : vector<2x4x1xf32>
    %23 = arith.divf %21, %22 : vector<2x4x1xf32>
    %24 = vector.broadcast %23 : vector<2x4x1xf32> to vector<2x4x256xf32>
    %25 = arith.mulf %0, %24 : vector<2x4x256xf32>
    %c0_19 = arith.constant 0 : index
    %c0_20 = arith.constant 0 : index
    %c0_21 = arith.constant 0 : index
    %26 = vector.load %arg6[%c0_19, %c0_20, %c0_21] : memref<2x4x256xf32, #tpu.memory_space<vmem>>, vector<2x4x256xf32>
    tpu.vector_store %arg6[%c0_19, %c0_20, %c0_21], %25 {strides = array<i32>} : memref<2x4x256xf32, #tpu.memory_space<vmem>>, vector<2x4x256xf32>,
    return
  }
  func.func @transform_0(%arg0: i32) -> (i32, i32, i32) {
    %c0_i32 = arith.constant 0 : i32
    %c0_i32_0 = arith.constant 0 : i32
    %c0_i32_1 = arith.constant 0 : i32
    return %arg0, %c0_i32, %c0_i32_0 : i32, i32, i32
  }
  func.func @transform_1(%arg0: i32) -> (i32, i32, i32) {
    %c0_i32 = arith.constant 0 : i32
    %c0_i32_0 = arith.constant 0 : i32
    %c0_i32_1 = arith.constant 0 : i32
    %c0_i32_2 = arith.constant 0 : i32
    return %c0_i32, %c0_i32_0, %c0_i32_1 : i32, i32, i32
  }
  func.func @transform_2(%arg0: i32) -> (i32, i32, i32) {
    %c0_i32 = arith.constant 0 : i32
    %c0_i32_0 = arith.constant 0 : i32
    %c0_i32_1 = arith.constant 0 : i32
    %c0_i32_2 = arith.constant 0 : i32
    return %c0_i32, %c0_i32_0, %c0_i32_1 : i32, i32, i32
  }
  func.func @transform_3(%arg0: i32) -> (i32, i32, i32) {
    %c0_i32 = arith.constant 0 : i32
    %c0_i32_0 = arith.constant 0 : i32
    %c0_i32_1 = arith.constant 0 : i32
    %c0_i32_2 = arith.constant 0 : i32
    return %c0_i32, %c0_i32_0, %c0_i32_1 : i32, i32, i32
  }
  func.func @transform_4(%arg0: i32) -> (i32, i32, i32) {
    %c0_i32 = arith.constant 0 : i32
    %c0_i32_0 = arith.constant 0 : i32
    %c0_i32_1 = arith.constant 0 : i32
    %c0_i32_2 = arith.constant 0 : i32
    return %c0_i32, %c0_i32_0, %c0_i32_1 : i32, i32, i32
  }
  func.func @transform_5(%arg0: i32) -> (i32, i32, i32) {
    %c0_i32 = arith.constant 0 : i32
    %c0_i32_0 = arith.constant 0 : i32
    %c0_i32_1 = arith.constant 0 : i32
    return %arg0, %c0_i32, %c0_i32_0 : i32, i32, i32
  }
}

</mosaic_0001>

<llo_original>
// kernel: tpu_custom_call.1
$region0: #{tpu_custom_call.1}
  #allocation0 [shape = 'u32[]', space=smem, size = 0x4, offset = 0x4, fixed_abs, tag = 'smem constant byte address 0x4 - core index']
  #allocation1 [shape = 'u32[72,128]{1,0:T(1,128)}', space=vmem, size = 0x9000, scoped, tag = 'internal scratch']
  %s0 = inlined_call_operand.vmem [shape: f32[2,4,256], index: 0, kind: input, shape index: {}]
  %s1 = inlined_call_operand.vmem [shape: f32[2,2,4], index: 1, kind: input, shape index: {}]
  %s2 = inlined_call_operand.vmem [shape: f32[2,2,1], index: 2, kind: input, shape index: {}]
  %s3 = inlined_call_operand.vmem [shape: f32[2,4,2], index: 3, kind: input, shape index: {}]
  %s4 = inlined_call_operand.vmem [shape: f32[2,4,1], index: 4, kind: input, shape index: {}]
  %s5 = inlined_call_operand.hbm [shape: f32[2,4,256], index: 5, kind: output, shape index: {}]
  %s6 = sld [smem:[#allocation0]]
  $region30: #{tpu_custom_call.1} parent=0
    _
  %s8 = ssub.s32 1, %s6
  %s9 = scalar_select 0, %s8, %s6
  $region1: #{tpu_custom_call.1} parent=0
    #allocation2 [shape = 'u8[8192]{0}', space=vmem, size = 0x2000, scoped, tag = 'output window, operand 0, single buffered']
    #allocation3 [shape = 's32[1]{0}', space=sflag, size = 0x4, scoped, tag = 'scoped memory for tpu_custom_call.1']
    %10 = vsyncpa [#allocation3], 0
    // Predicated region
    $region2: #{tpu_custom_call.1} parent=1 // pred_check
      _
    $region3: #{tpu_custom_call.1} parent=1 // pred_check_branch
      %12 = sbr.rel (0) target = $region5
    $region4: #{tpu_custom_call.1} parent=1 // pred_region
      _
    $region5: #{tpu_custom_call.1} parent=1 // pred_fallthru
      _
    // Predicated region
    $region6: #{tpu_custom_call.1} parent=1 // pred_check
      _
    $region7: #{tpu_custom_call.1} parent=1 // pred_check_branch
      %14 = sbr.rel (0) target = $region9
    $region8: #{tpu_custom_call.1} parent=1 // pred_region
      _
    $region9: #{tpu_custom_call.1} parent=1 // pred_fallthru
      _
    // Predicated region
    $region10: #{tpu_custom_call.1} parent=1 // pred_check
      _
    $region11: #{tpu_custom_call.1} parent=1 // pred_check_branch
      %16 = sbr.rel (0) target = $region13
    $region12: #{tpu_custom_call.1} parent=1 // pred_region
      _
    $region13: #{tpu_custom_call.1} parent=1 // pred_fallthru
      _
    // Predicated region
    $region14: #{tpu_custom_call.1} parent=1 // pred_check
      _
    $region15: #{tpu_custom_call.1} parent=1 // pred_check_branch
      %18 = sbr.rel (0) target = $region17
    $region16: #{tpu_custom_call.1} parent=1 // pred_region
      _
    $region17: #{tpu_custom_call.1} parent=1 // pred_fallthru
      _
    // Predicated region
    $region18: #{tpu_custom_call.1} parent=1 // pred_check
      _
    $region19: #{tpu_custom_call.1} parent=1 // pred_check_branch
      %20 = sbr.rel (0) target = $region21
    $region20: #{tpu_custom_call.1} parent=1 // pred_region
      _
    $region21: #{tpu_custom_call.1} parent=1 // pred_fallthru
      _
    %v21 = vld [vmem:[%s0] sm:$0xff]
    %v22 = vld [vmem:[%s0 + $0x8] sm:$0xff]
    %25 = vst [vmem:[#allocation1] ss:$2 sm:$0xff] %v21
    %v26 = vld.sshfl [vmem:[#allocation1] sm:$0xff pattern:$0x75316420]
    %v27 = vld.sshfl [vmem:[#allocation1 + $0x8] sm:$0xff pattern:$0x75316420]
    %s28 = scalar_lea.vmem [#allocation1], 16
    %29 = vst [vmem:[%s28] ss:$2 sm:$0xff] %v22
    %v30 = vld.sshfl [vmem:[#allocation1 + $0x10] sm:$0xff pattern:$0x75316420]
    %v31 = vld.sshfl [vmem:[#allocation1 + $0x18] sm:$0xff pattern:$0x75316420]
    %vm36 = vcmask 1043456
    %v37 = vsel %vm36, %v26, 0.0
    %v38 = vsel %vm36, %v27, 0.0
    %v39 = vadd.f32 %v37, %v38
    %40 = vadd.xlane.f32.xlu0 %v39
    %v41 = vpop.xlane.xlu0 %40
    %v42 = vsel %vm36, %v30, 0.0
    %v43 = vsel %vm36, %v31, 0.0
    %v44 = vadd.f32 %v42, %v43
    %45 = vadd.xlane.f32.xlu0 %v44
    %v46 = vpop.xlane.xlu0 %45
    %v47 = vmul.f32 %v41, 0.00390625
    %v48 = vmul.f32 %v46, 0.00390625
    %v49 = vld [vmem:[%s1] sm:$0x3]
    %v50 = vld [vmem:[%s1 + $0x2] sm:$0x3]
    %v51 = vld [vmem:[%s2] sm:$0x3]
    %v52 = vld [vmem:[%s2 + $0x2] sm:$0x3]
    %vm53 = vcmask 31744
    %v55 = vsel %vm53, %v49, 0
    %v58 = vsel %vm36, %v47, 0
    %60 = vmatpush.msra.mxu0 0.0
    %61 = vmatpush.msra.mxu0 0.0
    %62 = vmatpush.msra.mxu0 0.0
    %63 = vmatpush.msra.mxu0 0.0
    %64 = vmatpush.msra.mxu0 0.0
    %65 = vmatpush.msra.mxu0 0.0
    %66 = vmatpush.msra.mxu0 0.0
    %67 = vmatpush.msra.mxu0 0.0
    %68 = vmatpush.msra.mxu0 0.0
    %69 = vmatpush.msra.mxu0 0.0
    %70 = vmatpush.msra.mxu0 0.0
    %71 = vmatpush.msra.mxu0 0.0
    %72 = vmatpush.msra.mxu0 0.0
    %73 = vmatpush.msra.mxu0 0.0
    %74 = vmatpush.msra.mxu0 0.0
    %75 = vmatpush.msra.mxu0 %v58
    %76 = vmatmul.f32.gmra.mxu0 %v55
    %v77 = vpop.f32.mrf.mxu0
    %v78 = vadd.f32 %v51, %v77
    %79 = vdwg.mxu0
    %v81 = vsel %vm53, %v50, 0
    %v84 = vsel %vm36, %v48, 0
    %86 = vmatpush.msra.mxu0 0.0
    %87 = vmatpush.msra.mxu0 0.0
    %88 = vmatpush.msra.mxu0 0.0
    %89 = vmatpush.msra.mxu0 0.0
    %90 = vmatpush.msra.mxu0 0.0
    %91 = vmatpush.msra.mxu0 0.0
    %92 = vmatpush.msra.mxu0 0.0
    %93 = vmatpush.msra.mxu0 0.0
    %94 = vmatpush.msra.mxu0 0.0
    %95 = vmatpush.msra.mxu0 0.0
    %96 = vmatpush.msra.mxu0 0.0
    %97 = vmatpush.msra.mxu0 0.0
    %98 = vmatpush.msra.mxu0 0.0
    %99 = vmatpush.msra.mxu0 0.0
    %100 = vmatpush.msra.mxu0 0.0
    %101 = vmatpush.msra.mxu0 %v84
    %102 = vmatmul.f32.gmra.mxu0 %v81
    %v103 = vpop.f32.mrf.mxu0
    %v104 = vadd.f32 %v52, %v103
    %105 = vdwg.mxu0
    %v106 = vxor.u32 %v78, 2147483648
    %v107 = vxor.u32 %v104, 2147483648
    %v108 = vmul.f32 %v106, 1.442695
    %v109 = vpow.pop %v108
    %v110 = vmul.f32 %v107, 1.442695
    %v111 = vpow.pop %v110
    %v112 = vadd.f32 %v109, 1.0
    %v113 = vadd.f32 %v111, 1.0
    %v114 = vrcp.pop %v112
    %v115 = vmul.f32 %v112, %v114
    %v116 = vsub.f32 1.0, %v115
    %v117 = vmul.f32 %v114, %v116
    %v118 = vadd.f32 %v114, %v117
    %vm119 = vweird.f32 %v112
    %vm120 = vweird.f32 %v114
    %vm121 = vmor %vm119, %vm120
    %v122 = vsel %vm121, %v114, %v118
    %v123 = vand.u32 2147483647, %v112
    %vm124 = vcmp.eq.f32.partialorder %v123, 8.507059e+37
    %v125 = vand.u32 %v112, 2147483648
    %v126 = vor.u32 1.1754944e-38, %v125
    %v127 = vsel %vm124, %v126, %v122
    %v128 = vmul.f32 1.0, %v127
    %v129 = vrcp.pop %v113
    %v130 = vmul.f32 %v113, %v129
    %v131 = vsub.f32 1.0, %v130
    %v132 = vmul.f32 %v129, %v131
    %v133 = vadd.f32 %v129, %v132
    %vm134 = vweird.f32 %v113
    %vm135 = vweird.f32 %v129
    %vm136 = vmor %vm134, %vm135
    %v137 = vsel %vm136, %v129, %v133
    %v138 = vand.u32 2147483647, %v113
    %vm139 = vcmp.eq.f32.partialorder %v138, 8.507059e+37
    %v140 = vand.u32 %v113, 2147483648
    %v141 = vor.u32 1.1754944e-38, %v140
    %v142 = vsel %vm139, %v141, %v137
    %v143 = vmul.f32 1.0, %v142
    %v144 = vmul.f32 %v78, %v128
    %v145 = vmul.f32 %v104, %v143
    %v146 = vld [vmem:[%s3] sm:$0xf]
    %v147 = vld [vmem:[%s3 + $0x4] sm:$0xf]
    %v148 = vld [vmem:[%s4] sm:$0xf]
    %v149 = vld [vmem:[%s4 + $0x4] sm:$0xf]
    %vm150 = vcmask 15360
    %v152 = vsel %vm150, %v146, 0
    %vm154 = vcmask 1041408
    %v156 = vsel %vm154, %v144, 0
    %158 = vmatpush.msra.mxu0 0.0
    %159 = vmatpush.msra.mxu0 0.0
    %160 = vmatpush.msra.mxu0 0.0
    %161 = vmatpush.msra.mxu0 0.0
    %162 = vmatpush.msra.mxu0 0.0
    %163 = vmatpush.msra.mxu0 0.0
    %164 = vmatpush.msra.mxu0 0.0
    %165 = vmatpush.msra.mxu0 0.0
    %166 = vmatpush.msra.mxu0 0.0
    %167 = vmatpush.msra.mxu0 0.0
    %168 = vmatpush.msra.mxu0 0.0
    %169 = vmatpush.msra.mxu0 0.0
    %170 = vmatpush.msra.mxu0 0.0
    %171 = vmatpush.msra.mxu0 0.0
    %172 = vmatpush.msra.mxu0 0.0
    %173 = vmatpush.msra.mxu0 %v156
    %174 = vmatmul.f32.gmra.mxu0 %v152
    %v175 = vpop.f32.mrf.mxu0
    %v176 = vadd.f32 %v148, %v175
    %177 = vdwg.mxu0
    %v179 = vsel %vm150, %v147, 0
    %v182 = vsel %vm154, %v145, 0
    %184 = vmatpush.msra.mxu0 0.0
    %185 = vmatpush.msra.mxu0 0.0
    %186 = vmatpush.msra.mxu0 0.0
    %187 = vmatpush.msra.mxu0 0.0
    %188 = vmatpush.msra.mxu0 0.0
    %189 = vmatpush.msra.mxu0 0.0
    %190 = vmatpush.msra.mxu0 0.0
    %191 = vmatpush.msra.mxu0 0.0
    %192 = vmatpush.msra.mxu0 0.0
    %193 = vmatpush.msra.mxu0 0.0
    %194 = vmatpush.msra.mxu0 0.0
    %195 = vmatpush.msra.mxu0 0.0
    %196 = vmatpush.msra.mxu0 0.0
    %197 = vmatpush.msra.mxu0 0.0
    %198 = vmatpush.msra.mxu0 0.0
    %199 = vmatpush.msra.mxu0 %v182
    %200 = vmatmul.f32.gmra.mxu0 %v179
    %v201 = vpop.f32.mrf.mxu0
    %v202 = vadd.f32 %v149, %v201
    %203 = vdwg.mxu0
    %v204 = vxor.u32 %v176, 2147483648
    %v205 = vxor.u32 %v202, 2147483648
    %v206 = vmul.f32 %v204, 1.442695
    %v207 = vpow.pop %v206
    %v208 = vmul.f32 %v205, 1.442695
    %v209 = vpow.pop %v208
    %v210 = vadd.f32 %v207, 1.0
    %v211 = vadd.f32 %v209, 1.0
    %v212 = vrcp.pop %v210
    %v213 = vmul.f32 %v210, %v212
    %v214 = vsub.f32 1.0, %v213
    %v215 = vmul.f32 %v212, %v214
    %v216 = vadd.f32 %v212, %v215
    %vm217 = vweird.f32 %v210
    %vm218 = vweird.f32 %v212
    %vm219 = vmor %vm217, %vm218
    %v220 = vsel %vm219, %v212, %v216
    %v221 = vand.u32 2147483647, %v210
    %vm222 = vcmp.eq.f32.partialorder %v221, 8.507059e+37
    %v223 = vand.u32 %v210, 2147483648
    %v224 = vor.u32 1.1754944e-38, %v223
    %v225 = vsel %vm222, %v224, %v220
    %v226 = vmul.f32 1.0, %v225
    %v227 = vrcp.pop %v211
    %v228 = vmul.f32 %v211, %v227
    %v229 = vsub.f32 1.0, %v228
    %v230 = vmul.f32 %v227, %v229
    %v231 = vadd.f32 %v227, %v230
    %vm232 = vweird.f32 %v211
    %vm233 = vweird.f32 %v227
    %vm234 = vmor %vm232, %vm233
    %v235 = vsel %vm234, %v227, %v231
    %v236 = vand.u32 2147483647, %v211
    %vm237 = vcmp.eq.f32.partialorder %v236, 8.507059e+37
    %v238 = vand.u32 %v211, 2147483648
    %v239 = vor.u32 1.1754944e-38, %v238
    %v240 = vsel %vm237, %v239, %v235
    %v241 = vmul.f32 1.0, %v240
    %243 = vset.pattern.permute.xlu0 0
    %244 = vperm.xlu0 %243, %v226
    %v245 = vpop.permute.xlu0 %244
    %247 = vset.pattern.permute.xlu0 0
    %248 = vperm.xlu0 %247, %v241
    %v249 = vpop.permute.xlu0 %248
    %v251 = vunpack.c.l.s4 839922192
    %v252 = vunpack.c.0.s8 %v251
    %v253 = vperm.slane %v245, %v252
    %v255 = vunpack.c.l.s4 839922192
    %v256 = vunpack.c.0.s8 %v255
    %v257 = vperm.slane %v249, %v256
    %v260 = vmul.f32 %v21, %v253
    %v261 = vmul.f32 %v22, %v257
    %262 = vst [vmem:[#allocation2] sm:$0xff] %v260
    %263 = vst [vmem:[#allocation2 + $0x8] sm:$0xff] %v261
    // Predicated region
    $region22: #{tpu_custom_call.1} parent=1 // pred_check
      _
    $region23: #{tpu_custom_call.1} parent=1 // pred_check_branch
      %265 = sbr.rel (0) target = $region25
    $region24: #{tpu_custom_call.1} parent=1 // pred_region
      %267 = vsyncadd [#allocation3], 0
      %s268 = sshll.u32 [#allocation2], 4
      %s269 = int_to_ptr.vmem [resolvable:$true] %s268
      %s270 = sshll.u32 %s5, 4
      %s271 = int_to_ptr.hbm [resolvable:$true] %s270
      %276 = dma.vmem_to_hbm [thread:$0]  %s269, 256, %s271, [#allocation3], 128, 128, 8
    $region25: #{tpu_custom_call.1} parent=1 // pred_fallthru
      _
    // Predicated region
    $region26: #{tpu_custom_call.1} parent=1 // pred_check
      _
    $region27: #{tpu_custom_call.1} parent=1 // pred_check_branch
      %278 = sbr.rel (0) target = $region29
    $region28: #{tpu_custom_call.1} parent=1 // pred_region
      %280 = dma.done [#allocation3], 256
    $region29: #{tpu_custom_call.1} parent=1 // pred_fallthru
      _
    %281 = vsyncpa [#allocation3], 1

</llo_original>
